<compile_context>
chip_gen: v5e
topology: v5e:2x2
jax: 0.10.0
libtpu: 0.0.40
codegen_flags: <defaults>
</compile_context>

<pallas_src>
import functools

import jax
import jax.numpy as jnp
from jax.experimental import pallas as pl
from jax.experimental.pallas import tpu as pltpu


def _round_up(x, m):
    return ((x + m - 1) // m) * m


def _prelu(x, slope):
    # PReLU; `slope` broadcasts ([rows, 1] column or scalar).
    return jnp.maximum(x, 0.0) + slope * jnp.minimum(x, 0.0)


def _network_kernel(x_ref,
                    w1_ref, b1_ref, s1_ref,
                    w2_ref, b2_ref, s2_ref,
                    w3_ref, b3_ref, s3_ref,
                    w4_ref, b4_ref,
                    out_ref):
    # Transposed layout: features on sublanes, batch tile on lanes.
    x = x_ref[...]                                                       # [F_in, TB]

    # Fused (block-diagonal) low/high first layer + PReLU (per-branch slopes).
    h = jnp.dot(w1_ref[...], x, preferred_element_type=jnp.float32) + b1_ref[...]
    h = _prelu(h, s1_ref[...])                                           # [2*h0, TB]

    # Fused (block-diagonal) second layer + PReLU.
    h = jnp.dot(w2_ref[...], h, preferred_element_type=jnp.float32) + b2_ref[...]
    h = _prelu(h, s2_ref[...])                                           # [2*h1, TB]
    # Rows of `h` are already [low_hidden ; high_hidden] -> no concat needed.

    # Head: Linear -> PReLU -> Linear -> Sigmoid -> (x - 0.5) * 2
    h = jnp.dot(w3_ref[...], h, preferred_element_type=jnp.float32) + b3_ref[...]
    h = _prelu(h, s3_ref[...])                                           # [h2, TB]
    h = jnp.dot(w4_ref[...], h, preferred_element_type=jnp.float32) + b4_ref[...]
    out_ref[...] = (jax.nn.sigmoid(h) - 0.5) * 2.0                       # [nl, TB]


def make_params(key, N, low_dim, high_dim, hidden_dim=(10, 8, 6)):
    """Deterministic parameter init mimicking PyTorch Linear default init.

    Weights stored [in_features, out_features]; biases [1, out_features]."""
    nl = N * low_dim
    nh = N * high_dim
    h0, h1, h2 = hidden_dim

    def linear(key, fan_in, fan_out):
        kw, kb = jax.random.split(key)
        bound = 1.0 / jnp.sqrt(float(fan_in))
        w = jax.random.uniform(kw, (fan_in, fan_out), jnp.float32, -bound, bound)
        b = jax.random.uniform(kb, (1, fan_out), jnp.float32, -bound, bound)
        return w, b

    keys = jax.random.split(key, 6)
    wl1, bl1 = linear(keys[0], nl, h0)
    wl2, bl2 = linear(keys[1], h0, h1)
    wh1, bh1 = linear(keys[2], nh, h0)
    wh2, bh2 = linear(keys[3], h0, h1)
    w3, b3 = linear(keys[4], 2 * h1, h2)
    w4, b4 = linear(keys[5], h2, nl)

    # 5 PReLU modules, each with a single slope initialized to 0.25.
    alphas = jnp.full((5,), 0.25, dtype=jnp.float32)

    return dict(alphas=alphas,
                wl1=wl1, bl1=bl1, wl2=wl2, bl2=bl2,
                wh1=wh1, bh1=bh1, wh2=wh2, bh2=bh2,
                w3=w3, b3=b3, w4=w4, b4=b4)


def _fuse_params(params):
    """Build transposed / block-diagonal-fused parameters for the kernel."""
    wl1, bl1 = params["wl1"], params["bl1"]
    wl2, bl2 = params["wl2"], params["bl2"]
    wh1, bh1 = params["wh1"], params["bh1"]
    wh2, bh2 = params["wh2"], params["bh2"]
    w3, b3 = params["w3"], params["b3"]
    w4, b4 = params["w4"], params["b4"]
    a = params["alphas"]

    nl, h0 = wl1.shape
    nh = wh1.shape[0]
    h1 = wl2.shape[1]
    h2 = w3.shape[1]

    # Layer 1: block-diag of the two branch first layers, transposed -> [2*h0, nl+nh]
    w1 = jnp.zeros((2 * h0, nl + nh), jnp.float32)
    w1 = w1.at[:h0, :nl].set(wl1.T).at[h0:, nl:].set(wh1.T)
    b1 = jnp.concatenate([bl1, bh1], axis=1).T                         # [2*h0, 1]
    s1 = jnp.concatenate([jnp.full((h0, 1), a[0], jnp.float32),
                          jnp.full((h0, 1), a[2], jnp.float32)], axis=0)

    # Layer 2: block-diag of the two branch second layers, transposed -> [2*h1, 2*h0]
    w2 = jnp.zeros((2 * h1, 2 * h0), jnp.float32)
    w2 = w2.at[:h1, :h0].set(wl2.T).at[h1:, h0:].set(wh2.T)
    b2 = jnp.concatenate([bl2, bh2], axis=1).T                         # [2*h1, 1]
    s2 = jnp.concatenate([jnp.full((h1, 1), a[1], jnp.float32),
                          jnp.full((h1, 1), a[3], jnp.float32)], axis=0)

    # Head layers, transposed for the W @ x^T layout.
    w3t, b3t = w3.T, b3.T                                              # [h2, 2*h1], [h2, 1]
    s3 = jnp.full((h2, 1), a[4], jnp.float32)
    w4t, b4t = w4.T, b4.T                                              # [nl, h2], [nl, 1]

    return (w1, b1, s1, w2, b2, s2, w3t, b3t, s3, w4t, b4t)


@functools.partial(jax.jit, static_argnames=("N", "low_dim"))
def network_forward(data, params, *, N, low_dim):
    """Forward pass. `data` is [B, N*low_dim + N*high_dim] or
    [B, S, N*low_dim + N*high_dim] (3-D is flattened and restored)."""
    orig_shape = data.shape
    if data.ndim == 3:
        data = data.reshape(-1, data.shape[-1])

    nl = N * low_dim
    B, fin = data.shape

    fused = _fuse_params(params)
    (w1, b1, s1, w2, b2, s2, w3t, b3t, s3, w4t, b4t) = fused

    # Batch-on-lanes layout: pad batch to a lane-aligned tile, transpose to [F, B].
    TILE_B = min(2048, _round_up(B, 128))
    B_pad = _round_up(B, TILE_B)
    data_p = jnp.pad(data.astype(jnp.float32), ((0, B_pad - B), (0, 0)))
    x_t = data_p.T                                                     # [F_in, B_pad]

    grid = (B_pad // TILE_B,)

    # Weights/biases/slopes: full-extent blocks, constant index_map -> DMA'd once,
    # resident across grid steps.
    param_specs = [pl.BlockSpec(p.shape, lambda i: (0, 0)) for p in fused]

    h0x2 = w1.shape[0]
    h1x2 = w2.shape[0]
    h2 = w3t.shape[0]
    flops = 2 * B_pad * (fin * h0x2 + h0x2 * h1x2 + h1x2 * h2 + h2 * nl)
    bytes_accessed = 4 * (B_pad * (fin + nl) + sum(int(p.size) for p in fused))

    out_t = pl.pallas_call(
        _network_kernel,
        out_shape=jax.ShapeDtypeStruct((nl, B_pad), jnp.float32),
        grid=grid,
        in_specs=[pl.BlockSpec((fin, TILE_B), lambda i: (0, i))] + param_specs,
        out_specs=pl.BlockSpec((nl, TILE_B), lambda i: (0, i)),
        compiler_params=pltpu.CompilerParams(
            dimension_semantics=("parallel",),
            vmem_limit_bytes=32 * 1024 * 1024),
        cost_estimate=pl.CostEstimate(
            flops=flops,
            transcendentals=B_pad * nl,
            bytes_accessed=bytes_accessed),
    )(x_t, *fused)

    out = out_t.T[:B]                                                  # back to [B, nl]
    if len(orig_shape) == 3:
        out = out.reshape(orig_shape[0], orig_shape[1], nl)
    return out


def _reference_forward(data, params, N, low_dim):
    """Pure-JAX reference matching the PyTorch module (un-fused)."""
    nl = N * low_dim
    low = data[..., :nl]
    high = data[..., nl:]
    a = params["alphas"]

    def prelu(x, s):
        return jnp.maximum(x, 0.0) + s * jnp.minimum(x, 0.0)

    hl = prelu(low @ params["wl1"] + params["bl1"], a[0])
    hl = prelu(hl @ params["wl2"] + params["bl2"], a[1])
    hh = prelu(high @ params["wh1"] + params["bh1"], a[2])
    hh = prelu(hh @ params["wh2"] + params["bh2"], a[3])
    hidden = jnp.concatenate([hl, hh], axis=-1)
    z = prelu(hidden @ params["w3"] + params["b3"], a[4])
    z = jax.nn.sigmoid(z @ params["w4"] + params["b4"])
    return (z - 0.5) * 2.0


if __name__ == "__main__":
    # Small, consistent shapes: N=2, low_dim=3, high_dim=5 ->
    # input features = N*low_dim + N*high_dim = 6 + 10 = 16.
    N, low_dim, high_dim = 2, 3, 5
    batch = 8
    in_features = N * low_dim + N * high_dim

    key = jax.random.PRNGKey(0)
    k_data, k_params, k_data3 = jax.random.split(key, 3)

    params = make_params(k_params, N, low_dim, high_dim)

    # 2-D path
    data = jax.random.normal(k_data, (batch, in_features), dtype=jnp.float32)
    out = network_forward(data, params, N=N, low_dim=low_dim)
    jax.block_until_ready(out)

    assert out.shape == (batch, N * low_dim), out.shape
    assert bool(jnp.all(jnp.isfinite(out)))
    assert bool(jnp.all(out > -1.0)) and bool(jnp.all(out < 1.0))
    ref = _reference_forward(data, params, N, low_dim)
    assert bool(jnp.allclose(out, ref, atol=1e-5, rtol=1e-5)), \
        float(jnp.max(jnp.abs(out - ref)))

    # 3-D path
    data3 = jax.random.normal(k_data3, (2, 5, in_features), dtype=jnp.float32)
    out3 = network_forward(data3, params, N=N, low_dim=low_dim)
    jax.block_until_ready(out3)
    assert out3.shape == (2, 5, N * low_dim), out3.shape
    ref3 = _reference_forward(data3, params, N, low_dim)
    assert bool(jnp.allclose(out3, ref3, atol=1e-5, rtol=1e-5)), \
        float(jnp.max(jnp.abs(out3 - ref3)))

    print("KERNEL_OK")
</pallas_src>

<mosaic_0001>
module attributes {stable_mosaic.version = 11 : i64} {
  func.func @_network_kernel(%arg0: i32, %arg1: memref<16x128xf32, #tpu.memory_space<vmem>>, %arg2: memref<20x16xf32, #tpu.memory_space<vmem>>, %arg3: memref<20x1xf32, #tpu.memory_space<vmem>>, %arg4: memref<20x1xf32, #tpu.memory_space<vmem>>, %arg5: memref<16x20xf32, #tpu.memory_space<vmem>>, %arg6: memref<16x1xf32, #tpu.memory_space<vmem>>, %arg7: memref<16x1xf32, #tpu.memory_space<vmem>>, %arg8: memref<6x16xf32, #tpu.memory_space<vmem>>, %arg9: memref<6x1xf32, #tpu.memory_space<vmem>>, %arg10: memref<6x1xf32, #tpu.memory_space<vmem>>, %arg11: memref<6x6xf32, #tpu.memory_space<vmem>>, %arg12: memref<6x1xf32, #tpu.memory_space<vmem>>, %arg13: memref<6x128xf32, #tpu.memory_space<vmem>>) attributes {dimension_semantics = [#tpu.dimension_semantics<parallel>], iteration_bounds = array<i64: 1>, scalar_prefetch = 0 : i64, scratch_operands = 0 : i64, tpu.core_type = #tpu.core_type<tc>, window_params = [{transform_indices = @transform_0, window_bounds = array<i64: 16, 128>}, {pipeline_mode = #tpu.pipeline_mode<synchronous>, transform_indices = @transform_1, window_bounds = array<i64: 20, 16>}, {pipeline_mode = #tpu.pipeline_mode<synchronous>, transform_indices = @transform_2, window_bounds = array<i64: 20, 1>}, {pipeline_mode = #tpu.pipeline_mode<synchronous>, transform_indices = @transform_3, window_bounds = array<i64: 20, 1>}, {pipeline_mode = #tpu.pipeline_mode<synchronous>, transform_indices = @transform_4, window_bounds = array<i64: 16, 20>}, {pipeline_mode = #tpu.pipeline_mode<synchronous>, transform_indices = @transform_5, window_bounds = array<i64: 16, 1>}, {pipeline_mode = #tpu.pipeline_mode<synchronous>, transform_indices = @transform_6, window_bounds = array<i64: 16, 1>}, {pipeline_mode = #tpu.pipeline_mode<synchronous>, transform_indices = @transform_7, window_bounds = array<i64: 6, 16>}, {pipeline_mode = #tpu.pipeline_mode<synchronous>, transform_indices = @transform_8, window_bounds = array<i64: 6, 1>}, {pipeline_mode = #tpu.pipeline_mode<synchronous>, transform_indices = @transform_9, window_bounds = array<i64: 6, 1>}, {pipeline_mode = #tpu.pipeline_mode<synchronous>, transform_indices = @transform_10, window_bounds = array<i64: 6, 6>}, {pipeline_mode = #tpu.pipeline_mode<synchronous>, transform_indices = @transform_11, window_bounds = array<i64: 6, 1>}, {transform_indices = @transform_12, window_bounds = array<i64: 6, 128>}]} {
    %c0 = arith.constant 0 : index
    %c0_0 = arith.constant 0 : index
    %0 = vector.load %arg1[%c0, %c0_0] : memref<16x128xf32, #tpu.memory_space<vmem>>, vector<16x128xf32>
    %c0_1 = arith.constant 0 : index
    %c0_2 = arith.constant 0 : index
    %1 = vector.load %arg2[%c0_1, %c0_2] : memref<20x16xf32, #tpu.memory_space<vmem>>, vector<20x16xf32>
    %cst = arith.constant dense<0.000000e+00> : vector<20x128xf32>
    %2 = tpu.matmul %1, %0, %cst {dimension_numbers = #tpu.dot_dimension_numbers<[1], [0], [0], [1], [0, 0, 1, 1], [], []>} : vector<20x16xf32>, vector<16x128xf32>, vector<20x128xf32> -> vector<20x128xf32>
    %c0_3 = arith.constant 0 : index
    %c0_4 = arith.constant 0 : index
    %3 = vector.load %arg3[%c0_3, %c0_4] : memref<20x1xf32, #tpu.memory_space<vmem>>, vector<20x1xf32>
    %4 = vector.broadcast %3 : vector<20x1xf32> to vector<20x128xf32>
    %5 = arith.addf %2, %4 : vector<20x128xf32>
    %c0_5 = arith.constant 0 : index
    %c0_6 = arith.constant 0 : index
    %6 = vector.load %arg4[%c0_5, %c0_6] : memref<20x1xf32, #tpu.memory_space<vmem>>, vector<20x1xf32>
    %cst_7 = arith.constant 0.000000e+00 : f32
    %7 = vector.broadcast %cst_7 : f32 to vector<20x128xf32>
    %8 = arith.maximumf %5, %7 : vector<20x128xf32>
    %cst_8 = arith.constant 0.000000e+00 : f32
    %9 = vector.broadcast %cst_8 : f32 to vector<20x128xf32>
    %10 = arith.minimumf %5, %9 : vector<20x128xf32>
    %11 = vector.broadcast %6 : vector<20x1xf32> to vector<20x128xf32>
    %12 = arith.mulf %11, %10 : vector<20x128xf32>
    %13 = arith.addf %8, %12 : vector<20x128xf32>
    %c0_9 = arith.constant 0 : index
    %c0_10 = arith.constant 0 : index
    %14 = vector.load %arg5[%c0_9, %c0_10] : memref<16x20xf32, #tpu.memory_space<vmem>>, vector<16x20xf32>
    %cst_11 = arith.constant dense<0.000000e+00> : vector<16x128xf32>
    %15 = tpu.matmul %14, %13, %cst_11 {dimension_numbers = #tpu.dot_dimension_numbers<[1], [0], [0], [1], [0, 0, 1, 1], [], []>} : vector<16x20xf32>, vector<20x128xf32>, vector<16x128xf32> -> vector<16x128xf32>
    %c0_12 = arith.constant 0 : index
    %c0_13 = arith.constant 0 : index
    %16 = vector.load %arg6[%c0_12, %c0_13] : memref<16x1xf32, #tpu.memory_space<vmem>>, vector<16x1xf32>
    %17 = vector.broadcast %16 : vector<16x1xf32> to vector<16x128xf32>
    %18 = arith.addf %15, %17 : vector<16x128xf32>
    %c0_14 = arith.constant 0 : index
    %c0_15 = arith.constant 0 : index
    %19 = vector.load %arg7[%c0_14, %c0_15] : memref<16x1xf32, #tpu.memory_space<vmem>>, vector<16x1xf32>
    %cst_16 = arith.constant 0.000000e+00 : f32
    %20 = vector.broadcast %cst_16 : f32 to vector<16x128xf32>
    %21 = arith.maximumf %18, %20 : vector<16x128xf32>
    %cst_17 = arith.constant 0.000000e+00 : f32
    %22 = vector.broadcast %cst_17 : f32 to vector<16x128xf32>
    %23 = arith.minimumf %18, %22 : vector<16x128xf32>
    %24 = vector.broadcast %19 : vector<16x1xf32> to vector<16x128xf32>
    %25 = arith.mulf %24, %23 : vector<16x128xf32>
    %26 = arith.addf %21, %25 : vector<16x128xf32>
    %c0_18 = arith.constant 0 : index
    %c0_19 = arith.constant 0 : index
    %27 = vector.load %arg8[%c0_18, %c0_19] : memref<6x16xf32, #tpu.memory_space<vmem>>, vector<6x16xf32>
    %cst_20 = arith.constant dense<0.000000e+00> : vector<6x128xf32>
    %28 = tpu.matmul %27, %26, %cst_20 {dimension_numbers = #tpu.dot_dimension_numbers<[1], [0], [0], [1], [0, 0, 1, 1], [], []>} : vector<6x16xf32>, vector<16x128xf32>, vector<6x128xf32> -> vector<6x128xf32>
    %c0_21 = arith.constant 0 : index
    %c0_22 = arith.constant 0 : index
    %29 = vector.load %arg9[%c0_21, %c0_22] : memref<6x1xf32, #tpu.memory_space<vmem>>, vector<6x1xf32>
    %30 = vector.broadcast %29 : vector<6x1xf32> to vector<6x128xf32>
    %31 = arith.addf %28, %30 : vector<6x128xf32>
    %c0_23 = arith.constant 0 : index
    %c0_24 = arith.constant 0 : index
    %32 = vector.load %arg10[%c0_23, %c0_24] : memref<6x1xf32, #tpu.memory_space<vmem>>, vector<6x1xf32>
    %cst_25 = arith.constant 0.000000e+00 : f32
    %33 = vector.broadcast %cst_25 : f32 to vector<6x128xf32>
    %34 = arith.maximumf %31, %33 : vector<6x128xf32>
    %cst_26 = arith.constant 0.000000e+00 : f32
    %35 = vector.broadcast %cst_26 : f32 to vector<6x128xf32>
    %36 = arith.minimumf %31, %35 : vector<6x128xf32>
    %37 = vector.broadcast %32 : vector<6x1xf32> to vector<6x128xf32>
    %38 = arith.mulf %37, %36 : vector<6x128xf32>
    %39 = arith.addf %34, %38 : vector<6x128xf32>
    %c0_27 = arith.constant 0 : index
    %c0_28 = arith.constant 0 : index
    %40 = vector.load %arg11[%c0_27, %c0_28] : memref<6x6xf32, #tpu.memory_space<vmem>>, vector<6x6xf32>
    %cst_29 = arith.constant dense<0.000000e+00> : vector<6x128xf32>
    %41 = tpu.matmul %40, %39, %cst_29 {dimension_numbers = #tpu.dot_dimension_numbers<[1], [0], [0], [1], [0, 0, 1, 1], [], []>} : vector<6x6xf32>, vector<6x128xf32>, vector<6x128xf32> -> vector<6x128xf32>
    %c0_30 = arith.constant 0 : index
    %c0_31 = arith.constant 0 : index
    %42 = vector.load %arg12[%c0_30, %c0_31] : memref<6x1xf32, #tpu.memory_space<vmem>>, vector<6x1xf32>
    %43 = vector.broadcast %42 : vector<6x1xf32> to vector<6x128xf32>
    %44 = arith.addf %41, %43 : vector<6x128xf32>
    %45 = arith.negf %44 : vector<6x128xf32>
    %46 = math.exp %45 : vector<6x128xf32>
    %cst_32 = arith.constant 1.000000e+00 : f32
    %47 = vector.broadcast %cst_32 : f32 to vector<6x128xf32>
    %48 = arith.addf %47, %46 : vector<6x128xf32>
    %49 = arith.divf %47, %48 : vector<6x128xf32>
    %cst_33 = arith.constant 5.000000e-01 : f32
    %50 = vector.broadcast %cst_33 : f32 to vector<6x128xf32>
    %51 = arith.subf %49, %50 : vector<6x128xf32>
    %cst_34 = arith.constant 2.000000e+00 : f32
    %52 = vector.broadcast %cst_34 : f32 to vector<6x128xf32>
    %53 = arith.mulf %51, %52 : vector<6x128xf32>
    %c0_35 = arith.constant 0 : index
    %c0_36 = arith.constant 0 : index
    %54 = vector.load %arg13[%c0_35, %c0_36] : memref<6x128xf32, #tpu.memory_space<vmem>>, vector<6x128xf32>
    tpu.vector_store %arg13[%c0_35, %c0_36], %53 {strides = array<i32>} : memref<6x128xf32, #tpu.memory_space<vmem>>, vector<6x128xf32>,
    return
  }
  func.func @transform_0(%arg0: i32) -> (i32, i32) {
    %c0_i32 = arith.constant 0 : i32
    %c0_i32_0 = arith.constant 0 : i32
    return %c0_i32, %arg0 : i32, i32
  }
  func.func @transform_1(%arg0: i32) -> (i32, i32) {
    %c0_i32 = arith.constant 0 : i32
    %c0_i32_0 = arith.constant 0 : i32
    %c0_i32_1 = arith.constant 0 : i32
    return %c0_i32, %c0_i32_0 : i32, i32
  }
  func.func @transform_2(%arg0: i32) -> (i32, i32) {
    %c0_i32 = arith.constant 0 : i32
    %c0_i32_0 = arith.constant 0 : i32
    %c0_i32_1 = arith.constant 0 : i32
    return %c0_i32, %c0_i32_0 : i32, i32
  }
  func.func @transform_3(%arg0: i32) -> (i32, i32) {
    %c0_i32 = arith.constant 0 : i32
    %c0_i32_0 = arith.constant 0 : i32
    %c0_i32_1 = arith.constant 0 : i32
    return %c0_i32, %c0_i32_0 : i32, i32
  }
  func.func @transform_4(%arg0: i32) -> (i32, i32) {
    %c0_i32 = arith.constant 0 : i32
    %c0_i32_0 = arith.constant 0 : i32
    %c0_i32_1 = arith.constant 0 : i32
    return %c0_i32, %c0_i32_0 : i32, i32
  }
  func.func @transform_5(%arg0: i32) -> (i32, i32) {
    %c0_i32 = arith.constant 0 : i32
    %c0_i32_0 = arith.constant 0 : i32
    %c0_i32_1 = arith.constant 0 : i32
    return %c0_i32, %c0_i32_0 : i32, i32
  }
  func.func @transform_6(%arg0: i32) -> (i32, i32) {
    %c0_i32 = arith.constant 0 : i32
    %c0_i32_0 = arith.constant 0 : i32
    %c0_i32_1 = arith.constant 0 : i32
    return %c0_i32, %c0_i32_0 : i32, i32
  }
  func.func @transform_7(%arg0: i32) -> (i32, i32) {
    %c0_i32 = arith.constant 0 : i32
    %c0_i32_0 = arith.constant 0 : i32
    %c0_i32_1 = arith.constant 0 : i32
    return %c0_i32, %c0_i32_0 : i32, i32
  }
  func.func @transform_8(%arg0: i32) -> (i32, i32) {
    %c0_i32 = arith.constant 0 : i32
    %c0_i32_0 = arith.constant 0 : i32
    %c0_i32_1 = arith.constant 0 : i32
    return %c0_i32, %c0_i32_0 : i32, i32
  }
  func.func @transform_9(%arg0: i32) -> (i32, i32) {
    %c0_i32 = arith.constant 0 : i32
    %c0_i32_0 = arith.constant 0 : i32
    %c0_i32_1 = arith.constant 0 : i32
    return %c0_i32, %c0_i32_0 : i32, i32
  }
  func.func @transform_10(%arg0: i32) -> (i32, i32) {
    %c0_i32 = arith.constant 0 : i32
    %c0_i32_0 = arith.constant 0 : i32
    %c0_i32_1 = arith.constant 0 : i32
    return %c0_i32, %c0_i32_0 : i32, i32
  }
  func.func @transform_11(%arg0: i32) -> (i32, i32) {
    %c0_i32 = arith.constant 0 : i32
    %c0_i32_0 = arith.constant 0 : i32
    %c0_i32_1 = arith.constant 0 : i32
    return %c0_i32, %c0_i32_0 : i32, i32
  }
  func.func @transform_12(%arg0: i32) -> (i32, i32) {
    %c0_i32 = arith.constant 0 : i32
    %c0_i32_0 = arith.constant 0 : i32
    return %c0_i32, %arg0 : i32, i32
  }
}

</mosaic_0001>

<llo_original>
// kernel: network_forward.1
$region0: #{network_forward.1}
  #allocation0 [shape = 'u32[]', space=smem, size = 0x4, offset = 0x4, fixed_abs, tag = 'smem constant byte address 0x4 - core index']
  #allocation1 [shape = 'u32[72,128]{1,0:T(1,128)}', space=vmem, size = 0x9000, scoped, tag = 'internal scratch']
  %s0 = inlined_call_operand.vmem [shape: f32[16,128], index: 0, kind: input, shape index: {}]
  %s1 = inlined_call_operand.vmem [shape: f32[20,16], index: 1, kind: input, shape index: {}]
  %s2 = inlined_call_operand.vmem [shape: f32[20,1], index: 2, kind: input, shape index: {}]
  %s3 = inlined_call_operand.vmem [shape: f32[20,1], index: 3, kind: input, shape index: {}]
  %s4 = inlined_call_operand.vmem [shape: f32[16,20], index: 4, kind: input, shape index: {}]
  %s5 = inlined_call_operand.vmem [shape: f32[16,1], index: 5, kind: input, shape index: {}]
  %s6 = inlined_call_operand.vmem [shape: f32[16,1], index: 6, kind: input, shape index: {}]
  %s7 = inlined_call_operand.vmem [shape: f32[6,16], index: 7, kind: input, shape index: {}]
  %s8 = inlined_call_operand.vmem [shape: f32[6,1], index: 8, kind: input, shape index: {}]
  %s9 = inlined_call_operand.vmem [shape: f32[6,1], index: 9, kind: input, shape index: {}]
  %s10 = inlined_call_operand.vmem [shape: f32[6,6], index: 10, kind: input, shape index: {}]
  %s11 = inlined_call_operand.vmem [shape: f32[6,1], index: 11, kind: input, shape index: {}]
  %s12 = inlined_call_operand.vmem [shape: f32[6,128], index: 12, kind: output, shape index: {}]
  %s13 = sld [smem:[#allocation0]]
  $region58: #{network_forward.1} parent=0
    _
  %s15 = ssub.s32 1, %s13
  %s16 = scalar_select 0, %s15, %s13
  // Predicated region
  $region2: #{network_forward.1} parent=0 // pred_check
    _
  $region3: #{network_forward.1} parent=0 // pred_check_branch
    %18 = sbr.rel (0) target = $region5
  $region4: #{network_forward.1} parent=0 // pred_region
    _
  $region5: #{network_forward.1} parent=0 // pred_fallthru
    _
  // Predicated region
  $region6: #{network_forward.1} parent=0 // pred_check
    _
  $region7: #{network_forward.1} parent=0 // pred_check_branch
    %20 = sbr.rel (0) target = $region9
  $region8: #{network_forward.1} parent=0 // pred_region
    _
  $region9: #{network_forward.1} parent=0 // pred_fallthru
    _
  // Predicated region
  $region10: #{network_forward.1} parent=0 // pred_check
    _
  $region11: #{network_forward.1} parent=0 // pred_check_branch
    %22 = sbr.rel (0) target = $region13
  $region12: #{network_forward.1} parent=0 // pred_region
    _
  $region13: #{network_forward.1} parent=0 // pred_fallthru
    _
  // Predicated region
  $region14: #{network_forward.1} parent=0 // pred_check
    _
  $region15: #{network_forward.1} parent=0 // pred_check_branch
    %24 = sbr.rel (0) target = $region17
  $region16: #{network_forward.1} parent=0 // pred_region
    _
  $region17: #{network_forward.1} parent=0 // pred_fallthru
    _
  // Predicated region
  $region18: #{network_forward.1} parent=0 // pred_check
    _
  $region19: #{network_forward.1} parent=0 // pred_check_branch
    %26 = sbr.rel (0) target = $region21
  $region20: #{network_forward.1} parent=0 // pred_region
    _
  $region21: #{network_forward.1} parent=0 // pred_fallthru
    _
  // Predicated region
  $region22: #{network_forward.1} parent=0 // pred_check
    _
  $region23: #{network_forward.1} parent=0 // pred_check_branch
    %28 = sbr.rel (0) target = $region25
  $region24: #{network_forward.1} parent=0 // pred_region
    _
  $region25: #{network_forward.1} parent=0 // pred_fallthru
    _
  // Predicated region
  $region26: #{network_forward.1} parent=0 // pred_check
    _
  $region27: #{network_forward.1} parent=0 // pred_check_branch
    %30 = sbr.rel (0) target = $region29
  $region28: #{network_forward.1} parent=0 // pred_region
    _
  $region29: #{network_forward.1} parent=0 // pred_fallthru
    _
  // Predicated region
  $region30: #{network_forward.1} parent=0 // pred_check
    _
  $region31: #{network_forward.1} parent=0 // pred_check_branch
    %32 = sbr.rel (0) target = $region33
  $region32: #{network_forward.1} parent=0 // pred_region
    _
  $region33: #{network_forward.1} parent=0 // pred_fallthru
    _
  // Predicated region
  $region34: #{network_forward.1} parent=0 // pred_check
    _
  $region35: #{network_forward.1} parent=0 // pred_check_branch
    %34 = sbr.rel (0) target = $region37
  $region36: #{network_forward.1} parent=0 // pred_region
    _
  $region37: #{network_forward.1} parent=0 // pred_fallthru
    _
  // Predicated region
  $region38: #{network_forward.1} parent=0 // pred_check
    _
  $region39: #{network_forward.1} parent=0 // pred_check_branch
    %36 = sbr.rel (0) target = $region41
  $region40: #{network_forward.1} parent=0 // pred_region
    _
  $region41: #{network_forward.1} parent=0 // pred_fallthru
    _
  // Predicated region
  $region42: #{network_forward.1} parent=0 // pred_check
    _
  $region43: #{network_forward.1} parent=0 // pred_check_branch
    %38 = sbr.rel (0) target = $region45
  $region44: #{network_forward.1} parent=0 // pred_region
    _
  $region45: #{network_forward.1} parent=0 // pred_fallthru
    _
  // Predicated region
  $region46: #{network_forward.1} parent=0 // pred_check
    _
  $region47: #{network_forward.1} parent=0 // pred_check_branch
    %40 = sbr.rel (0) target = $region49
  $region48: #{network_forward.1} parent=0 // pred_region
    _
  $region49: #{network_forward.1} parent=0 // pred_fallthru
    _
  %v41 = vld [vmem:[%s0] sm:$0xff]
  %v42 = vld [vmem:[%s0 + $0x8] sm:$0xff]
  %v43 = vld [vmem:[%s1] sm:$0xff]
  %v44 = vld [vmem:[%s1 + $0x8] sm:$0xff]
  %v45 = vld [vmem:[%s1 + $0x10] sm:$0xf]
  %v46 = vld [vmem:[%s2] sm:$0xff]
  %v47 = vld [vmem:[%s2 + $0x8] sm:$0xff]
  %v48 = vld [vmem:[%s2 + $0x10] sm:$0xf]
  %50 = vset.pattern.permute.xlu0 0
  %51 = vperm.xlu0 %50, %v46
  %v52 = vpop.permute.xlu0 %51
  %55 = vset.pattern.permute.xlu0 0
  %56 = vperm.xlu0 %55, %v47
  %v57 = vpop.permute.xlu0 %56
  %60 = vset.pattern.permute.xlu0 0
  %61 = vperm.xlu0 %60, %v48
  %v62 = vpop.permute.xlu0 %61
  %vm64 = vcmask 130048
  %v66 = vsel %vm64, %v43, 0
  %v69 = vsel %vm64, %v44, 0
  %v72 = vsel %vm64, %v45, 0
  %74 = vmatpush.msra.mxu0 0.0
  %75 = vmatpush.msra.mxu0 0.0
  %76 = vmatpush.msra.mxu0 0.0
  %77 = vmatpush.msra.mxu0 0.0
  %78 = vmatpush.msra.mxu0 0.0
  %79 = vmatpush.msra.mxu0 0.0
  %80 = vmatpush.msra.mxu0 0.0
  %81 = vmatpush.msra.mxu0 0.0
  %82 = vmatpush.msra.mxu0 0.0
  %83 = vmatpush.msra.mxu0 0.0
  %84 = vmatpush.msra.mxu0 0.0
  %85 = vmatpush.msra.mxu0 0.0
  %86 = vmatpush.msra.mxu0 0.0
  %87 = vmatpush.msra.mxu0 0.0
  %88 = vmatpush.msra.mxu0 %v42
  %89 = vmatpush.msra.mxu0 %v41
  %90 = vmatmul.f32.gmra.mxu0 %v66
  %v91 = vpop.f32.mrf.mxu0
  %v92 = vadd.f32 %v52, %v91
  %93 = vmatmul.f32.gmra.mxu0 %v69
  %v94 = vpop.f32.mrf.mxu0
  %v95 = vadd.f32 %v57, %v94
  %96 = vmatmul.f32.gmra.mxu0 %v72
  %v97 = vpop.f32.mrf.mxu0
  %v98 = vadd.f32 %v62, %v97
  %99 = vdwg.mxu0
  %v100 = vld [vmem:[%s3] sm:$0xff]
  %v101 = vld [vmem:[%s3 + $0x8] sm:$0xff]
  %v102 = vld [vmem:[%s3 + $0x10] sm:$0xf]
  %v103 = vmax.f32 %v92, 0.0
  %v104 = vmax.f32 %v95, 0.0
  %v105 = vmax.f32 %v98, 0.0
  %v106 = vmin.f32 %v92, 0.0
  %v107 = vmin.f32 %v95, 0.0
  %v108 = vmin.f32 %v98, 0.0
  %110 = vset.pattern.permute.xlu0 0
  %111 = vperm.xlu0 %110, %v100
  %v112 = vpop.permute.xlu0 %111
  %115 = vset.pattern.permute.xlu0 0
  %116 = vperm.xlu0 %115, %v101
  %v117 = vpop.permute.xlu0 %116
  %120 = vset.pattern.permute.xlu0 0
  %121 = vperm.xlu0 %120, %v102
  %v122 = vpop.permute.xlu0 %121
  %v124 = vmul.f32 %v112, %v106
  %v125 = vmul.f32 %v117, %v107
  %v126 = vmul.f32 %v122, %v108
  %v127 = vadd.f32 %v103, %v124
  %v128 = vadd.f32 %v104, %v125
  %v129 = vadd.f32 %v105, %v126
  %v130 = vld [vmem:[%s4] sm:$0xff]
  %v131 = vld [vmem:[%s4 + $0x8] sm:$0xff]
  %v132 = vld [vmem:[%s5] sm:$0xff]
  %v133 = vld [vmem:[%s5 + $0x8] sm:$0xff]
  %135 = vset.pattern.permute.xlu0 0
  %136 = vperm.xlu0 %135, %v132
  %v137 = vpop.permute.xlu0 %136
  %140 = vset.pattern.permute.xlu0 0
  %141 = vperm.xlu0 %140, %v133
  %v142 = vpop.permute.xlu0 %141
  %vm144 = vcmask 162816
  %v146 = vsel %vm144, %v130, 0
  %v149 = vsel %vm144, %v131, 0
  %vm151 = vcmask 1043456
  %v153 = vsel %vm151, %v129, 0
  %155 = vmatpush.msra.mxu0 0.0
  %156 = vmatpush.msra.mxu0 0.0
  %157 = vmatpush.msra.mxu0 0.0
  %158 = vmatpush.msra.mxu0 0.0
  %159 = vmatpush.msra.mxu0 0.0
  %160 = vmatpush.msra.mxu0 0.0
  %161 = vmatpush.msra.mxu0 0.0
  %162 = vmatpush.msra.mxu0 0.0
  %163 = vmatpush.msra.mxu0 0.0
  %164 = vmatpush.msra.mxu0 0.0
  %165 = vmatpush.msra.mxu0 0.0
  %166 = vmatpush.msra.mxu0 0.0
  %167 = vmatpush.msra.mxu0 0.0
  %168 = vmatpush.msra.mxu0 %v153
  %169 = vmatpush.msra.mxu0 %v128
  %170 = vmatpush.msra.mxu0 %v127
  %171 = vmatmul.f32.gmra.mxu0 %v146
  %v172 = vpop.f32.mrf.mxu0
  %v173 = vadd.f32 %v137, %v172
  %174 = vmatmul.f32.gmra.mxu0 %v149
  %v175 = vpop.f32.mrf.mxu0
  %v176 = vadd.f32 %v142, %v175
  %177 = vdwg.mxu0
  %v178 = vld [vmem:[%s6] sm:$0xff]
  %v179 = vld [vmem:[%s6 + $0x8] sm:$0xff]
  %v180 = vmax.f32 %v173, 0.0
  %v181 = vmax.f32 %v176, 0.0
  %v182 = vmin.f32 %v173, 0.0
  %v183 = vmin.f32 %v176, 0.0
  %185 = vset.pattern.permute.xlu0 0
  %186 = vperm.xlu0 %185, %v178
  %v187 = vpop.permute.xlu0 %186
  %190 = vset.pattern.permute.xlu0 0
  %191 = vperm.xlu0 %190, %v179
  %v192 = vpop.permute.xlu0 %191
  %v194 = vmul.f32 %v187, %v182
  %v195 = vmul.f32 %v192, %v183
  %v196 = vadd.f32 %v180, %v194
  %v197 = vadd.f32 %v181, %v195
  %v198 = vld [vmem:[%s7] sm:$0x3f]
  %v199 = vld [vmem:[%s8] sm:$0x3f]
  %201 = vset.pattern.permute.xlu0 0
  %202 = vperm.xlu0 %201, %v199
  %v203 = vpop.permute.xlu0 %202
  %v206 = vsel %vm64, %v198, 0
  %208 = vmatpush.msra.mxu0 0.0
  %209 = vmatpush.msra.mxu0 0.0
  %210 = vmatpush.msra.mxu0 0.0
  %211 = vmatpush.msra.mxu0 0.0
  %212 = vmatpush.msra.mxu0 0.0
  %213 = vmatpush.msra.mxu0 0.0
  %214 = vmatpush.msra.mxu0 0.0
  %215 = vmatpush.msra.mxu0 0.0
  %216 = vmatpush.msra.mxu0 0.0
  %217 = vmatpush.msra.mxu0 0.0
  %218 = vmatpush.msra.mxu0 0.0
  %219 = vmatpush.msra.mxu0 0.0
  %220 = vmatpush.msra.mxu0 0.0
  %221 = vmatpush.msra.mxu0 0.0
  %222 = vmatpush.msra.mxu0 %v197
  %223 = vmatpush.msra.mxu0 %v196
  %224 = vmatmul.f32.gmra.mxu0 %v206
  %v225 = vpop.f32.mrf.mxu0
  %v226 = vadd.f32 %v203, %v225
  %227 = vdwg.mxu0
  %v228 = vld [vmem:[%s9] sm:$0x3f]
  %v229 = vmax.f32 %v226, 0.0
  %v230 = vmin.f32 %v226, 0.0
  %232 = vset.pattern.permute.xlu0 0
  %233 = vperm.xlu0 %232, %v228
  %v234 = vpop.permute.xlu0 %233
  %v236 = vmul.f32 %v234, %v230
  %v237 = vadd.f32 %v229, %v236
  %v238 = vld [vmem:[%s10] sm:$0x3f]
  %v239 = vld [vmem:[%s11] sm:$0x3f]
  %241 = vset.pattern.permute.xlu0 0
  %242 = vperm.xlu0 %241, %v239
  %v243 = vpop.permute.xlu0 %242
  %vm245 = vcmask 48128
  %v247 = vsel %vm245, %v238, 0
  %vm249 = vcmask 1045504
  %v251 = vsel %vm249, %v237, 0
  %253 = vmatpush.msra.mxu0 0.0
  %254 = vmatpush.msra.mxu0 0.0
  %255 = vmatpush.msra.mxu0 0.0
  %256 = vmatpush.msra.mxu0 0.0
  %257 = vmatpush.msra.mxu0 0.0
  %258 = vmatpush.msra.mxu0 0.0
  %259 = vmatpush.msra.mxu0 0.0
  %260 = vmatpush.msra.mxu0 0.0
  %261 = vmatpush.msra.mxu0 0.0
  %262 = vmatpush.msra.mxu0 0.0
  %263 = vmatpush.msra.mxu0 0.0
  %264 = vmatpush.msra.mxu0 0.0
  %265 = vmatpush.msra.mxu0 0.0
  %266 = vmatpush.msra.mxu0 0.0
  %267 = vmatpush.msra.mxu0 0.0
  %268 = vmatpush.msra.mxu0 %v251
  %269 = vmatmul.f32.gmra.mxu0 %v247
  %v270 = vpop.f32.mrf.mxu0
  %v271 = vadd.f32 %v243, %v270
  %272 = vdwg.mxu0
  %v273 = vxor.u32 %v271, 2147483648
  %v274 = vmul.f32 %v273, 1.442695
  %v275 = vpow.pop %v274
  %v276 = vadd.f32 %v275, 1.0
  %v277 = vrcp.pop %v276
  %v278 = vmul.f32 %v276, %v277
  %v279 = vsub.f32 1.0, %v278
  %v280 = vmul.f32 %v277, %v279
  %v281 = vadd.f32 %v277, %v280
  %vm282 = vweird.f32 %v276
  %vm283 = vweird.f32 %v277
  %vm284 = vmor %vm282, %vm283
  %v285 = vsel %vm284, %v277, %v281
  %v286 = vand.u32 2147483647, %v276
  %vm287 = vcmp.eq.f32.partialorder %v286, 8.507059e+37
  %v288 = vand.u32 %v276, 2147483648
  %v289 = vor.u32 1.1754944e-38, %v288
  %v290 = vsel %vm287, %v289, %v285
  %v291 = vmul.f32 1.0, %v290
  %v292 = vsub.f32 %v291, 0.5
  %v293 = vmul.f32 %v292, 2.0
  %294 = vst [vmem:[%s12] sm:$0x3f] %v293
  // Predicated region
  $region50: #{network_forward.1} parent=0 // pred_check
    _
  $region51: #{network_forward.1} parent=0 // pred_check_branch
    %296 = sbr.rel (0) target = $region53
  $region52: #{network_forward.1} parent=0 // pred_region
    _
  $region53: #{network_forward.1} parent=0 // pred_fallthru
    _
  // Predicated region
  $region54: #{network_forward.1} parent=0 // pred_check
    _
  $region55: #{network_forward.1} parent=0 // pred_check_branch
    %298 = sbr.rel (0) target = $region57
  $region56: #{network_forward.1} parent=0 // pred_region
    _
  $region57: #{network_forward.1} parent=0 // pred_fallthru
    _

</llo_original>
